<compile_context>
chip_gen: v7x
topology: tpu7x:2x2x1
jax: 0.10.0
libtpu: 0.0.40
codegen_flags: <defaults>
</compile_context>

<pallas_src>
import jax
import jax.numpy as jnp
from jax import lax
from jax.experimental import pallas as pl
from jax.experimental.pallas import tpu as pltpu


def lstm_kernel(x_ref, w_ih_ref, w_hh_ref, b_ref, fc_w_ref, fc_b_ref, out_ref,
                xproj_ref):
    # x_ref:    (T*B, I)   time-major inputs, flattened over (T, B)
    # w_ih_ref: (I, 4H)    transposed weight_ih
    # w_hh_ref: (4H, 4H)   transposed weight_hh, rows [H:4H) zero-padded
    # b_ref:    (1, 4H)    bias_ih + bias_hh
    # fc_w_ref: (4H, 1)    transposed fc weight, rows [H:4H) zero-padded
    # fc_b_ref: (1,)       fc bias (SMEM scalar)
    # out_ref:  (B, 1)
    # xproj_ref:(T*B, 4H)  VMEM scratch for the hoisted input projection
    TB = x_ref.shape[0]
    G = w_hh_ref.shape[1]          # 4H (= 128 -> exactly one lane tile)
    H = G // 4
    B = out_ref.shape[0]
    T = TB // B

    # ---- Input projection for ALL timesteps as one MXU matmul (+ bias) ----
    xproj_ref[...] = (
        jnp.dot(x_ref[...], w_ih_ref[...], preferred_element_type=jnp.float32)
        + b_ref[...]
    )

    # Hoist the recurrent weight load out of the (unrolled) time loop.
    w_hh = w_hh_ref[...]           # (4H, 4H); rows [H:) are zero.

    def step(t, carry):
        h, c = carry               # (B, 4H) full-lane state; lanes [0:H) are the real h/c.
        start = pl.multiple_of(t * B, B)
        gates = xproj_ref[pl.ds(start, B), :] + jnp.dot(
            h, w_hh, preferred_element_type=jnp.float32
        )                                                   # (B, 4H) true i|f|g|o pre-acts
        # Full-width nonlinearities (no masked sub-vreg EUP ops), then XLU rolls
        # to align the f / g / o quarters onto the i quarter (lanes [0:H)).
        sig = jax.nn.sigmoid(gates)
        th = jnp.tanh(gates)
        i_g = sig                                   # lanes [0:H): input gate
        f_g = pltpu.roll(sig, shift=3 * H, axis=1)  # lanes [0:H): forget gate
        g_g = pltpu.roll(th, shift=2 * H, axis=1)   # lanes [0:H): cell gate
        o_g = pltpu.roll(sig, shift=1 * H, axis=1)  # lanes [0:H): output gate
        c_new = f_g * c + i_g * g_g
        h_new = o_g * jnp.tanh(c_new)
        # Lanes [H:) of h_new/c_new hold bounded junk; the zero-padded rows of
        # w_hh / fc_w guarantee they never contribute to the real computation.
        return h_new, c_new

    h0 = jnp.zeros((B, G), jnp.float32)
    c0 = jnp.zeros((B, G), jnp.float32)
    h_last, _ = lax.fori_loop(0, T, step, (h0, c0), unroll=True)

    # fc on the last hidden state: (B, 4H) @ (4H, 1) + bias (padded rows are zero).
    out_ref[...] = (
        jnp.dot(h_last, fc_w_ref[...], preferred_element_type=jnp.float32)
        + fc_b_ref[0]
    ).astype(out_ref.dtype)


def prepare_params(w_ih, w_hh, b_ih, b_hh, fc_w, fc_b):
    """One-time parameter preprocessing (transpose / pad / fold biases).

    Call once when loading parameters, NOT on every forward pass.
    """
    four_h, H = w_hh.shape
    assert four_h == 4 * H
    G = 4 * H
    w_ih_t = jnp.transpose(w_ih).astype(jnp.float32)                   # (I, 4H)
    w_hh_pad = jnp.zeros((G, G), jnp.float32).at[:H, :].set(
        jnp.transpose(w_hh).astype(jnp.float32))                       # (4H, 4H)
    b = (b_ih + b_hh).reshape(1, G).astype(jnp.float32)                # (1, 4H)
    fc_w_pad = jnp.zeros((G, 1), jnp.float32).at[:H, :].set(
        jnp.transpose(fc_w).astype(jnp.float32))                       # (4H, 1)
    fc_b1 = fc_b.reshape(1).astype(jnp.float32)                        # (1,)
    return w_ih_t, w_hh_pad, b, fc_w_pad, fc_b1


@jax.jit
def lstm_forward(x, w_ih_t, w_hh_pad, b, fc_w_pad, fc_b1):
    """x: (T, B, 6) float32.  Returns (B, 1) float32 — matches Lstm.forward."""
    T, B, I = x.shape
    G = w_hh_pad.shape[1]
    x2d = x.astype(jnp.float32).reshape(T * B, I)   # row-major, layout-free reshape

    vmem = pl.BlockSpec(memory_space=pltpu.MemorySpace.VMEM)
    smem = pl.BlockSpec(memory_space=pltpu.MemorySpace.SMEM)
    # TODO(synk): if the batch dimension is ever scaled up, add a batch grid with
    # dimension_semantics=("parallel",) so v7x's two TensorCores split the work.
    return pl.pallas_call(
        lstm_kernel,
        out_shape=jax.ShapeDtypeStruct((B, 1), jnp.float32),
        in_specs=[vmem, vmem, vmem, vmem, vmem, smem],
        out_specs=vmem,
        scratch_shapes=[pltpu.VMEM((T * B, G), jnp.float32)],
    )(x2d, w_ih_t, w_hh_pad, b, fc_w_pad, fc_b1)


def lstm_reference(x, w_ih, w_hh, b_ih, b_hh, fc_w, fc_b):
    """Pure-JAX reference of the same forward (PyTorch LSTM semantics)."""
    T, B, I = x.shape
    H = w_hh.shape[1]
    h = jnp.zeros((B, H), jnp.float32)
    c = jnp.zeros((B, H), jnp.float32)
    for t in range(T):
        g = x[t] @ w_ih.T + b_ih + h @ w_hh.T + b_hh
        i_g = jax.nn.sigmoid(g[:, 0 * H:1 * H])
        f_g = jax.nn.sigmoid(g[:, 1 * H:2 * H])
        g_g = jnp.tanh(g[:, 2 * H:3 * H])
        o_g = jax.nn.sigmoid(g[:, 3 * H:4 * H])
        c = f_g * c + i_g * g_g
        h = o_g * jnp.tanh(c)
    return h @ fc_w.T + fc_b


if __name__ == "__main__":
    SEQ, BATCH, INPUT, HIDDEN = 8, 2, 6, 32

    key = jax.random.PRNGKey(0)
    kx, k1, k2, k3, k4, k5, k6 = jax.random.split(key, 7)

    # Deterministic synthetic parameters (PyTorch nn.LSTM / nn.Linear shapes).
    scale = 1.0 / jnp.sqrt(HIDDEN)
    x = jax.random.normal(kx, (SEQ, BATCH, INPUT), dtype=jnp.float32)
    w_ih = jax.random.uniform(k1, (4 * HIDDEN, INPUT), minval=-scale, maxval=scale)
    w_hh = jax.random.uniform(k2, (4 * HIDDEN, HIDDEN), minval=-scale, maxval=scale)
    b_ih = jax.random.uniform(k3, (4 * HIDDEN,), minval=-scale, maxval=scale)
    b_hh = jax.random.uniform(k4, (4 * HIDDEN,), minval=-scale, maxval=scale)
    fc_w = jax.random.uniform(k5, (1, HIDDEN), minval=-scale, maxval=scale)
    fc_b = jax.random.uniform(k6, (1,), minval=-scale, maxval=scale)

    # One-time parameter prep (out of the per-call path).
    params = prepare_params(w_ih, w_hh, b_ih, b_hh, fc_w, fc_b)
    params = jax.tree.map(jax.block_until_ready, params)

    out = lstm_forward(x, *params)
    out = jax.block_until_ready(out)

    ref = lstm_reference(x, w_ih, w_hh, b_ih, b_hh, fc_w, fc_b)
    assert out.shape == (BATCH, 1)
    assert jnp.allclose(out, ref, atol=1e-4, rtol=1e-4), (out, ref)

    print("KERNEL_OK")
</pallas_src>

<mosaic_0001>
module attributes {stable_mosaic.version = 11 : i64} {
  func.func @lstm_kernel(%arg0: memref<16x6xf32, #tpu.memory_space<vmem>>, %arg1: memref<6x128xf32, #tpu.memory_space<vmem>>, %arg2: memref<128x128xf32, #tpu.memory_space<vmem>>, %arg3: memref<1x128xf32, #tpu.memory_space<vmem>>, %arg4: memref<128x1xf32, #tpu.memory_space<vmem>>, %arg5: memref<1xf32, #tpu.memory_space<smem>>, %arg6: memref<2x1xf32, #tpu.memory_space<vmem>>, %arg7: memref<16x128xf32, #tpu.memory_space<vmem>>) attributes {dimension_semantics = [], scalar_prefetch = 0 : i64, scratch_operands = 1 : i64, tpu.core_type = #tpu.core_type<tc>} {
    %c0 = arith.constant 0 : index
    %c0_0 = arith.constant 0 : index
    %0 = vector.load %arg0[%c0, %c0_0] : memref<16x6xf32, #tpu.memory_space<vmem>>, vector<16x6xf32>
    %c0_1 = arith.constant 0 : index
    %c0_2 = arith.constant 0 : index
    %1 = vector.load %arg1[%c0_1, %c0_2] : memref<6x128xf32, #tpu.memory_space<vmem>>, vector<6x128xf32>
    %cst = arith.constant dense<0.000000e+00> : vector<16x128xf32>
    %2 = tpu.matmul %0, %1, %cst {dimension_numbers = #tpu.dot_dimension_numbers<[1], [0], [0], [1], [0, 0, 1, 1], [], []>} : vector<16x6xf32>, vector<6x128xf32>, vector<16x128xf32> -> vector<16x128xf32>
    %c0_3 = arith.constant 0 : index
    %c0_4 = arith.constant 0 : index
    %3 = vector.load %arg3[%c0_3, %c0_4] : memref<1x128xf32, #tpu.memory_space<vmem>>, vector<1x128xf32>
    %4 = vector.broadcast %3 : vector<1x128xf32> to vector<16x128xf32>
    %5 = arith.addf %2, %4 : vector<16x128xf32>
    %c0_5 = arith.constant 0 : index
    %c0_6 = arith.constant 0 : index
    %6 = vector.load %arg7[%c0_5, %c0_6] : memref<16x128xf32, #tpu.memory_space<vmem>>, vector<16x128xf32>
    tpu.vector_store %arg7[%c0_5, %c0_6], %5 {strides = array<i32>} : memref<16x128xf32, #tpu.memory_space<vmem>>, vector<16x128xf32>,
    %c0_7 = arith.constant 0 : index
    %c0_8 = arith.constant 0 : index
    %7 = vector.load %arg2[%c0_7, %c0_8] : memref<128x128xf32, #tpu.memory_space<vmem>>, vector<128x128xf32>
    %cst_9 = arith.constant 0.000000e+00 : f32
    %8 = vector.broadcast %cst_9 : f32 to vector<2x128xf32>
    %cst_10 = arith.constant 0.000000e+00 : f32
    %9 = vector.broadcast %cst_10 : f32 to vector<2x128xf32>
    %c0_i32 = arith.constant 0 : i32
    %c2_i32 = arith.constant 2 : i32
    %10 = arith.muli %c0_i32, %c2_i32 : i32
    %11 = tpu.assume_multiple %10, 2 : i32
    %12 = arith.index_cast %11 : i32 to index
    %c0_11 = arith.constant 0 : index
    %13 = vector.load %arg7[%12, %c0_11] : memref<16x128xf32, #tpu.memory_space<vmem>>, vector<2x128xf32>
    %cst_12 = arith.constant dense<0.000000e+00> : vector<2x128xf32>
    %14 = tpu.matmul %8, %7, %cst_12 {dimension_numbers = #tpu.dot_dimension_numbers<[1], [0], [0], [1], [0, 0, 1, 1], [], []>} : vector<2x128xf32>, vector<128x128xf32>, vector<2x128xf32> -> vector<2x128xf32>
    %15 = arith.addf %13, %14 : vector<2x128xf32>
    %16 = arith.negf %15 : vector<2x128xf32>
    %17 = math.exp %16 : vector<2x128xf32>
    %cst_13 = arith.constant 1.000000e+00 : f32
    %18 = vector.broadcast %cst_13 : f32 to vector<2x128xf32>
    %19 = arith.addf %18, %17 : vector<2x128xf32>
    %20 = arith.divf %18, %19 : vector<2x128xf32>
    %21 = math.tanh %15 : vector<2x128xf32>
    %c96_i32 = arith.constant 96 : i32
    %22 = tpu.dynamic_rotate %20 by %c96_i32 dim 1 : vector<2x128xf32>, i32 -> vector<2x128xf32>
    %c64_i32 = arith.constant 64 : i32
    %23 = tpu.dynamic_rotate %21 by %c64_i32 dim 1 : vector<2x128xf32>, i32 -> vector<2x128xf32>
    %c32_i32 = arith.constant 32 : i32
    %24 = tpu.dynamic_rotate %20 by %c32_i32 dim 1 : vector<2x128xf32>, i32 -> vector<2x128xf32>
    %25 = arith.mulf %22, %9 : vector<2x128xf32>
    %26 = arith.mulf %20, %23 : vector<2x128xf32>
    %27 = arith.addf %25, %26 : vector<2x128xf32>
    %28 = math.tanh %27 : vector<2x128xf32>
    %29 = arith.mulf %24, %28 : vector<2x128xf32>
    %c1_i32 = arith.constant 1 : i32
    %c2_i32_14 = arith.constant 2 : i32
    %30 = arith.muli %c1_i32, %c2_i32_14 : i32
    %31 = tpu.assume_multiple %30, 2 : i32
    %32 = arith.index_cast %31 : i32 to index
    %c0_15 = arith.constant 0 : index
    %33 = vector.load %arg7[%32, %c0_15] : memref<16x128xf32, #tpu.memory_space<vmem>>, vector<2x128xf32>
    %cst_16 = arith.constant dense<0.000000e+00> : vector<2x128xf32>
    %34 = tpu.matmul %29, %7, %cst_16 {dimension_numbers = #tpu.dot_dimension_numbers<[1], [0], [0], [1], [0, 0, 1, 1], [], []>} : vector<2x128xf32>, vector<128x128xf32>, vector<2x128xf32> -> vector<2x128xf32>
    %35 = arith.addf %33, %34 : vector<2x128xf32>
    %36 = arith.negf %35 : vector<2x128xf32>
    %37 = math.exp %36 : vector<2x128xf32>
    %cst_17 = arith.constant 1.000000e+00 : f32
    %38 = vector.broadcast %cst_17 : f32 to vector<2x128xf32>
    %39 = arith.addf %38, %37 : vector<2x128xf32>
    %40 = arith.divf %38, %39 : vector<2x128xf32>
    %41 = math.tanh %35 : vector<2x128xf32>
    %c96_i32_18 = arith.constant 96 : i32
    %42 = tpu.dynamic_rotate %40 by %c96_i32_18 dim 1 : vector<2x128xf32>, i32 -> vector<2x128xf32>
    %c64_i32_19 = arith.constant 64 : i32
    %43 = tpu.dynamic_rotate %41 by %c64_i32_19 dim 1 : vector<2x128xf32>, i32 -> vector<2x128xf32>
    %c32_i32_20 = arith.constant 32 : i32
    %44 = tpu.dynamic_rotate %40 by %c32_i32_20 dim 1 : vector<2x128xf32>, i32 -> vector<2x128xf32>
    %45 = arith.mulf %42, %27 : vector<2x128xf32>
    %46 = arith.mulf %40, %43 : vector<2x128xf32>
    %47 = arith.addf %45, %46 : vector<2x128xf32>
    %48 = math.tanh %47 : vector<2x128xf32>
    %49 = arith.mulf %44, %48 : vector<2x128xf32>
    %c2_i32_21 = arith.constant 2 : i32
    %c2_i32_22 = arith.constant 2 : i32
    %50 = arith.muli %c2_i32_21, %c2_i32_22 : i32
    %51 = tpu.assume_multiple %50, 2 : i32
    %52 = arith.index_cast %51 : i32 to index
    %c0_23 = arith.constant 0 : index
    %53 = vector.load %arg7[%52, %c0_23] : memref<16x128xf32, #tpu.memory_space<vmem>>, vector<2x128xf32>
    %cst_24 = arith.constant dense<0.000000e+00> : vector<2x128xf32>
    %54 = tpu.matmul %49, %7, %cst_24 {dimension_numbers = #tpu.dot_dimension_numbers<[1], [0], [0], [1], [0, 0, 1, 1], [], []>} : vector<2x128xf32>, vector<128x128xf32>, vector<2x128xf32> -> vector<2x128xf32>
    %55 = arith.addf %53, %54 : vector<2x128xf32>
    %56 = arith.negf %55 : vector<2x128xf32>
    %57 = math.exp %56 : vector<2x128xf32>
    %cst_25 = arith.constant 1.000000e+00 : f32
    %58 = vector.broadcast %cst_25 : f32 to vector<2x128xf32>
    %59 = arith.addf %58, %57 : vector<2x128xf32>
    %60 = arith.divf %58, %59 : vector<2x128xf32>
    %61 = math.tanh %55 : vector<2x128xf32>
    %c96_i32_26 = arith.constant 96 : i32
    %62 = tpu.dynamic_rotate %60 by %c96_i32_26 dim 1 : vector<2x128xf32>, i32 -> vector<2x128xf32>
    %c64_i32_27 = arith.constant 64 : i32
    %63 = tpu.dynamic_rotate %61 by %c64_i32_27 dim 1 : vector<2x128xf32>, i32 -> vector<2x128xf32>
    %c32_i32_28 = arith.constant 32 : i32
    %64 = tpu.dynamic_rotate %60 by %c32_i32_28 dim 1 : vector<2x128xf32>, i32 -> vector<2x128xf32>
    %65 = arith.mulf %62, %47 : vector<2x128xf32>
    %66 = arith.mulf %60, %63 : vector<2x128xf32>
    %67 = arith.addf %65, %66 : vector<2x128xf32>
    %68 = math.tanh %67 : vector<2x128xf32>
    %69 = arith.mulf %64, %68 : vector<2x128xf32>
    %c3_i32 = arith.constant 3 : i32
    %c2_i32_29 = arith.constant 2 : i32
    %70 = arith.muli %c3_i32, %c2_i32_29 : i32
    %71 = tpu.assume_multiple %70, 2 : i32
    %72 = arith.index_cast %71 : i32 to index
    %c0_30 = arith.constant 0 : index
    %73 = vector.load %arg7[%72, %c0_30] : memref<16x128xf32, #tpu.memory_space<vmem>>, vector<2x128xf32>
    %cst_31 = arith.constant dense<0.000000e+00> : vector<2x128xf32>
    %74 = tpu.matmul %69, %7, %cst_31 {dimension_numbers = #tpu.dot_dimension_numbers<[1], [0], [0], [1], [0, 0, 1, 1], [], []>} : vector<2x128xf32>, vector<128x128xf32>, vector<2x128xf32> -> vector<2x128xf32>
    %75 = arith.addf %73, %74 : vector<2x128xf32>
    %76 = arith.negf %75 : vector<2x128xf32>
    %77 = math.exp %76 : vector<2x128xf32>
    %cst_32 = arith.constant 1.000000e+00 : f32
    %78 = vector.broadcast %cst_32 : f32 to vector<2x128xf32>
    %79 = arith.addf %78, %77 : vector<2x128xf32>
    %80 = arith.divf %78, %79 : vector<2x128xf32>
    %81 = math.tanh %75 : vector<2x128xf32>
    %c96_i32_33 = arith.constant 96 : i32
    %82 = tpu.dynamic_rotate %80 by %c96_i32_33 dim 1 : vector<2x128xf32>, i32 -> vector<2x128xf32>
    %c64_i32_34 = arith.constant 64 : i32
    %83 = tpu.dynamic_rotate %81 by %c64_i32_34 dim 1 : vector<2x128xf32>, i32 -> vector<2x128xf32>
    %c32_i32_35 = arith.constant 32 : i32
    %84 = tpu.dynamic_rotate %80 by %c32_i32_35 dim 1 : vector<2x128xf32>, i32 -> vector<2x128xf32>
    %85 = arith.mulf %82, %67 : vector<2x128xf32>
    %86 = arith.mulf %80, %83 : vector<2x128xf32>
    %87 = arith.addf %85, %86 : vector<2x128xf32>
    %88 = math.tanh %87 : vector<2x128xf32>
    %89 = arith.mulf %84, %88 : vector<2x128xf32>
    %c4_i32 = arith.constant 4 : i32
    %c2_i32_36 = arith.constant 2 : i32
    %90 = arith.muli %c4_i32, %c2_i32_36 : i32
    %91 = tpu.assume_multiple %90, 2 : i32
    %92 = arith.index_cast %91 : i32 to index
    %c0_37 = arith.constant 0 : index
    %93 = vector.load %arg7[%92, %c0_37] : memref<16x128xf32, #tpu.memory_space<vmem>>, vector<2x128xf32>
    %cst_38 = arith.constant dense<0.000000e+00> : vector<2x128xf32>
    %94 = tpu.matmul %89, %7, %cst_38 {dimension_numbers = #tpu.dot_dimension_numbers<[1], [0], [0], [1], [0, 0, 1, 1], [], []>} : vector<2x128xf32>, vector<128x128xf32>, vector<2x128xf32> -> vector<2x128xf32>
    %95 = arith.addf %93, %94 : vector<2x128xf32>
    %96 = arith.negf %95 : vector<2x128xf32>
    %97 = math.exp %96 : vector<2x128xf32>
    %cst_39 = arith.constant 1.000000e+00 : f32
    %98 = vector.broadcast %cst_39 : f32 to vector<2x128xf32>
    %99 = arith.addf %98, %97 : vector<2x128xf32>
    %100 = arith.divf %98, %99 : vector<2x128xf32>
    %101 = math.tanh %95 : vector<2x128xf32>
    %c96_i32_40 = arith.constant 96 : i32
    %102 = tpu.dynamic_rotate %100 by %c96_i32_40 dim 1 : vector<2x128xf32>, i32 -> vector<2x128xf32>
    %c64_i32_41 = arith.constant 64 : i32
    %103 = tpu.dynamic_rotate %101 by %c64_i32_41 dim 1 : vector<2x128xf32>, i32 -> vector<2x128xf32>
    %c32_i32_42 = arith.constant 32 : i32
    %104 = tpu.dynamic_rotate %100 by %c32_i32_42 dim 1 : vector<2x128xf32>, i32 -> vector<2x128xf32>
    %105 = arith.mulf %102, %87 : vector<2x128xf32>
    %106 = arith.mulf %100, %103 : vector<2x128xf32>
    %107 = arith.addf %105, %106 : vector<2x128xf32>
    %108 = math.tanh %107 : vector<2x128xf32>
    %109 = arith.mulf %104, %108 : vector<2x128xf32>
    %c5_i32 = arith.constant 5 : i32
    %c2_i32_43 = arith.constant 2 : i32
    %110 = arith.muli %c5_i32, %c2_i32_43 : i32
    %111 = tpu.assume_multiple %110, 2 : i32
    %112 = arith.index_cast %111 : i32 to index
    %c0_44 = arith.constant 0 : index
    %113 = vector.load %arg7[%112, %c0_44] : memref<16x128xf32, #tpu.memory_space<vmem>>, vector<2x128xf32>
    %cst_45 = arith.constant dense<0.000000e+00> : vector<2x128xf32>
    %114 = tpu.matmul %109, %7, %cst_45 {dimension_numbers = #tpu.dot_dimension_numbers<[1], [0], [0], [1], [0, 0, 1, 1], [], []>} : vector<2x128xf32>, vector<128x128xf32>, vector<2x128xf32> -> vector<2x128xf32>
    %115 = arith.addf %113, %114 : vector<2x128xf32>
    %116 = arith.negf %115 : vector<2x128xf32>
    %117 = math.exp %116 : vector<2x128xf32>
    %cst_46 = arith.constant 1.000000e+00 : f32
    %118 = vector.broadcast %cst_46 : f32 to vector<2x128xf32>
    %119 = arith.addf %118, %117 : vector<2x128xf32>
    %120 = arith.divf %118, %119 : vector<2x128xf32>
    %121 = math.tanh %115 : vector<2x128xf32>
    %c96_i32_47 = arith.constant 96 : i32
    %122 = tpu.dynamic_rotate %120 by %c96_i32_47 dim 1 : vector<2x128xf32>, i32 -> vector<2x128xf32>
    %c64_i32_48 = arith.constant 64 : i32
    %123 = tpu.dynamic_rotate %121 by %c64_i32_48 dim 1 : vector<2x128xf32>, i32 -> vector<2x128xf32>
    %c32_i32_49 = arith.constant 32 : i32
    %124 = tpu.dynamic_rotate %120 by %c32_i32_49 dim 1 : vector<2x128xf32>, i32 -> vector<2x128xf32>
    %125 = arith.mulf %122, %107 : vector<2x128xf32>
    %126 = arith.mulf %120, %123 : vector<2x128xf32>
    %127 = arith.addf %125, %126 : vector<2x128xf32>
    %128 = math.tanh %127 : vector<2x128xf32>
    %129 = arith.mulf %124, %128 : vector<2x128xf32>
    %c6_i32 = arith.constant 6 : i32
    %c2_i32_50 = arith.constant 2 : i32
    %130 = arith.muli %c6_i32, %c2_i32_50 : i32
    %131 = tpu.assume_multiple %130, 2 : i32
    %132 = arith.index_cast %131 : i32 to index
    %c0_51 = arith.constant 0 : index
    %133 = vector.load %arg7[%132, %c0_51] : memref<16x128xf32, #tpu.memory_space<vmem>>, vector<2x128xf32>
    %cst_52 = arith.constant dense<0.000000e+00> : vector<2x128xf32>
    %134 = tpu.matmul %129, %7, %cst_52 {dimension_numbers = #tpu.dot_dimension_numbers<[1], [0], [0], [1], [0, 0, 1, 1], [], []>} : vector<2x128xf32>, vector<128x128xf32>, vector<2x128xf32> -> vector<2x128xf32>
    %135 = arith.addf %133, %134 : vector<2x128xf32>
    %136 = arith.negf %135 : vector<2x128xf32>
    %137 = math.exp %136 : vector<2x128xf32>
    %cst_53 = arith.constant 1.000000e+00 : f32
    %138 = vector.broadcast %cst_53 : f32 to vector<2x128xf32>
    %139 = arith.addf %138, %137 : vector<2x128xf32>
    %140 = arith.divf %138, %139 : vector<2x128xf32>
    %141 = math.tanh %135 : vector<2x128xf32>
    %c96_i32_54 = arith.constant 96 : i32
    %142 = tpu.dynamic_rotate %140 by %c96_i32_54 dim 1 : vector<2x128xf32>, i32 -> vector<2x128xf32>
    %c64_i32_55 = arith.constant 64 : i32
    %143 = tpu.dynamic_rotate %141 by %c64_i32_55 dim 1 : vector<2x128xf32>, i32 -> vector<2x128xf32>
    %c32_i32_56 = arith.constant 32 : i32
    %144 = tpu.dynamic_rotate %140 by %c32_i32_56 dim 1 : vector<2x128xf32>, i32 -> vector<2x128xf32>
    %145 = arith.mulf %142, %127 : vector<2x128xf32>
    %146 = arith.mulf %140, %143 : vector<2x128xf32>
    %147 = arith.addf %145, %146 : vector<2x128xf32>
    %148 = math.tanh %147 : vector<2x128xf32>
    %149 = arith.mulf %144, %148 : vector<2x128xf32>
    %c7_i32 = arith.constant 7 : i32
    %c2_i32_57 = arith.constant 2 : i32
    %150 = arith.muli %c7_i32, %c2_i32_57 : i32
    %151 = tpu.assume_multiple %150, 2 : i32
    %152 = arith.index_cast %151 : i32 to index
    %c0_58 = arith.constant 0 : index
    %153 = vector.load %arg7[%152, %c0_58] : memref<16x128xf32, #tpu.memory_space<vmem>>, vector<2x128xf32>
    %cst_59 = arith.constant dense<0.000000e+00> : vector<2x128xf32>
    %154 = tpu.matmul %149, %7, %cst_59 {dimension_numbers = #tpu.dot_dimension_numbers<[1], [0], [0], [1], [0, 0, 1, 1], [], []>} : vector<2x128xf32>, vector<128x128xf32>, vector<2x128xf32> -> vector<2x128xf32>
    %155 = arith.addf %153, %154 : vector<2x128xf32>
    %156 = arith.negf %155 : vector<2x128xf32>
    %157 = math.exp %156 : vector<2x128xf32>
    %cst_60 = arith.constant 1.000000e+00 : f32
    %158 = vector.broadcast %cst_60 : f32 to vector<2x128xf32>
    %159 = arith.addf %158, %157 : vector<2x128xf32>
    %160 = arith.divf %158, %159 : vector<2x128xf32>
    %161 = math.tanh %155 : vector<2x128xf32>
    %c96_i32_61 = arith.constant 96 : i32
    %162 = tpu.dynamic_rotate %160 by %c96_i32_61 dim 1 : vector<2x128xf32>, i32 -> vector<2x128xf32>
    %c64_i32_62 = arith.constant 64 : i32
    %163 = tpu.dynamic_rotate %161 by %c64_i32_62 dim 1 : vector<2x128xf32>, i32 -> vector<2x128xf32>
    %c32_i32_63 = arith.constant 32 : i32
    %164 = tpu.dynamic_rotate %160 by %c32_i32_63 dim 1 : vector<2x128xf32>, i32 -> vector<2x128xf32>
    %165 = arith.mulf %162, %147 : vector<2x128xf32>
    %166 = arith.mulf %160, %163 : vector<2x128xf32>
    %167 = arith.addf %165, %166 : vector<2x128xf32>
    %168 = math.tanh %167 : vector<2x128xf32>
    %169 = arith.mulf %164, %168 : vector<2x128xf32>
    %c8_i32 = arith.constant 8 : i32
    %c0_64 = arith.constant 0 : index
    %c0_65 = arith.constant 0 : index
    %170 = vector.load %arg4[%c0_64, %c0_65] : memref<128x1xf32, #tpu.memory_space<vmem>>, vector<128x1xf32>
    %cst_66 = arith.constant dense<0.000000e+00> : vector<2x1xf32>
    %171 = tpu.matmul %169, %170, %cst_66 {dimension_numbers = #tpu.dot_dimension_numbers<[1], [0], [0], [1], [0, 0, 1, 1], [], []>} : vector<2x128xf32>, vector<128x1xf32>, vector<2x1xf32> -> vector<2x1xf32>
    %c0_67 = arith.constant 0 : index
    %172 = memref.load %arg5[%c0_67] : memref<1xf32, #tpu.memory_space<smem>>
    %173 = vector.broadcast %172 : f32 to vector<2x1xf32>
    %174 = arith.addf %171, %173 : vector<2x1xf32>
    %c0_68 = arith.constant 0 : index
    %c0_69 = arith.constant 0 : index
    %175 = vector.load %arg6[%c0_68, %c0_69] : memref<2x1xf32, #tpu.memory_space<vmem>>, vector<2x1xf32>
    tpu.vector_store %arg6[%c0_68, %c0_69], %174 {strides = array<i32>} : memref<2x1xf32, #tpu.memory_space<vmem>>, vector<2x1xf32>,
    return
  }
}

</mosaic_0001>

<llo_original>
// kernel: lstm_forward.1
$region0: #{lstm_forward.1}
  #allocation0 [shape = 'u32[]', space=smem, size = 0x4, offset = 0x4, fixed_abs, tag = 'smem constant byte address 0x4 - core index']
  #allocation1 [shape = 'u32[144,128]{1,0:T(1,128)}', space=vmem, size = 0x12000, scoped, tag = 'internal scratch']
  #allocation2 [shape = 'f32[16,128]{1,0:T(8,128)}', space=vmem, size = 0x2000, scoped, tag = 'scratch operand']
  #allocation3 [shape = 'f32[1]{0:T(128)S(6)}', space=smem, size = 0x200, scoped, tag = 'scoped memory for lstm_forward.1']
  %s0 = inlined_call_operand.vmem [shape: f32[16,6], index: 0, kind: input, shape index: {}]
  %s1 = inlined_call_operand.vmem [shape: f32[6,128], index: 1, kind: input, shape index: {}]
  %s2 = inlined_call_operand.vmem [shape: f32[128,128], index: 2, kind: input, shape index: {}]
  %s3 = inlined_call_operand.vmem [shape: f32[1,128], index: 3, kind: input, shape index: {}]
  %s4 = inlined_call_operand.vmem [shape: f32[128,1], index: 4, kind: input, shape index: {}]
  %s5 = inlined_call_operand.<no memory space> [shape: f32[1], index: 5, kind: input, shape index: {}]
  %s6 = inlined_call_operand.vmem [shape: f32[2,1], index: 6, kind: output, shape index: {}]
  %s7 = sld [smem:[#allocation0]]
  $region34: #{lstm_forward.1} parent=0
    _
  %s9 = ssub.s32 1, %s7
  %s10 = scalar_select 0, %s9, %s7
  %11 = sst [smem:[#allocation3]] %s5
  // Predicated region
  $region2: #{lstm_forward.1} parent=0 // pred_check
    _
  $region3: #{lstm_forward.1} parent=0 // pred_check_branch
    %13 = sbr.rel (0) target = $region5
  $region4: #{lstm_forward.1} parent=0 // pred_region
    _
  $region5: #{lstm_forward.1} parent=0 // pred_fallthru
    _
  // Predicated region
  $region6: #{lstm_forward.1} parent=0 // pred_check
    _
  $region7: #{lstm_forward.1} parent=0 // pred_check_branch
    %15 = sbr.rel (0) target = $region9
  $region8: #{lstm_forward.1} parent=0 // pred_region
    _
  $region9: #{lstm_forward.1} parent=0 // pred_fallthru
    _
  // Predicated region
  $region10: #{lstm_forward.1} parent=0 // pred_check
    _
  $region11: #{lstm_forward.1} parent=0 // pred_check_branch
    %17 = sbr.rel (0) target = $region13
  $region12: #{lstm_forward.1} parent=0 // pred_region
    _
  $region13: #{lstm_forward.1} parent=0 // pred_fallthru
    _
  // Predicated region
  $region14: #{lstm_forward.1} parent=0 // pred_check
    _
  $region15: #{lstm_forward.1} parent=0 // pred_check_branch
    %19 = sbr.rel (0) target = $region17
  $region16: #{lstm_forward.1} parent=0 // pred_region
    _
  $region17: #{lstm_forward.1} parent=0 // pred_fallthru
    _
  // Predicated region
  $region18: #{lstm_forward.1} parent=0 // pred_check
    _
  $region19: #{lstm_forward.1} parent=0 // pred_check_branch
    %21 = sbr.rel (0) target = $region21
  $region20: #{lstm_forward.1} parent=0 // pred_region
    _
  $region21: #{lstm_forward.1} parent=0 // pred_fallthru
    _
  // Predicated region
  $region22: #{lstm_forward.1} parent=0 // pred_check
    _
  $region23: #{lstm_forward.1} parent=0 // pred_check_branch
    %23 = sbr.rel (0) target = $region25
  $region24: #{lstm_forward.1} parent=0 // pred_region
    _
  $region25: #{lstm_forward.1} parent=0 // pred_fallthru
    _
  %v24 = vld [vmem:[%s0] sm:$0xff]
  %v25 = vld [vmem:[%s0 + $0x8] sm:$0xff]
  %v26 = vld [vmem:[%s1] sm:$0x3f]
  %v27 = vld [vmem:[%s3] sm:$0x1]
  %v29 = vlaneseq
  %v30 = vshrl.u32 %v29, 7
  %v31 = vsub.s32 0, %v30
  %v32 = vrot.slane %v27, %v31
  %vm34 = vcmask 48128
  %v36 = vsel %vm34, %v24, 0
  %v39 = vsel %vm34, %v25, 0
  %vm41 = vcmask 1045504
  %v43 = vsel %vm41, %v26, 0
  %45 = vmatprep.subr.mxu0 0.0
  %46 = vmatpush1.msra.mxu0 %v43
  %47 = vmatprep.subr.mxu0 0.0
  %48 = vmatpush1.msra.mxu0 0.0
  %49 = vmatprep.subr.mxu0 0.0
  %50 = vmatpush1.msra.mxu0 0.0
  %51 = vmatprep.subr.mxu0 0.0
  %52 = vmatpush1.msra.mxu0 0.0
  %53 = vmatprep.subr.mxu0 0.0
  %54 = vmatpush1.msra.mxu0 0.0
  %55 = vmatprep.subr.mxu0 0.0
  %56 = vmatpush1.msra.mxu0 0.0
  %57 = vmatprep.subr.mxu0 0.0
  %58 = vmatpush1.msra.mxu0 0.0
  %59 = vmatprep.subr.mxu0 0.0
  %60 = vmatpush1.msra.mxu0 0.0
  %61 = vmatprep.subr.mxu0 0.0
  %62 = vmatpush1.msra.mxu0 0.0
  %63 = vmatprep.subr.mxu0 0.0
  %64 = vmatpush1.msra.mxu0 0.0
  %65 = vmatprep.subr.mxu0 0.0
  %66 = vmatpush1.msra.mxu0 0.0
  %67 = vmatprep.subr.mxu0 0.0
  %68 = vmatpush1.msra.mxu0 0.0
  %69 = vmatprep.subr.mxu0 0.0
  %70 = vmatpush1.msra.mxu0 0.0
  %71 = vmatprep.subr.mxu0 0.0
  %72 = vmatpush1.msra.mxu0 0.0
  %73 = vmatprep.subr.mxu0 0.0
  %74 = vmatpush1.msra.mxu0 0.0
  %75 = vmatprep.subr.mxu0 0.0
  %76 = vmatpush1.msra.mxu0 0.0
  %77 = vmatprep.subr.mxu0 0.0
  %78 = vmatpush1.msra.mxu0 0.0
  %79 = vmatprep.subr.mxu0 0.0
  %80 = vmatpush1.msra.mxu0 0.0
  %81 = vmatprep.subr.mxu0 0.0
  %82 = vmatpush1.msra.mxu0 0.0
  %83 = vmatprep.subr.mxu0 0.0
  %84 = vmatpush1.msra.mxu0 0.0
  %85 = vmatprep.subr.mxu0 0.0
  %86 = vmatpush1.msra.mxu0 0.0
  %87 = vmatprep.subr.mxu0 0.0
  %88 = vmatpush1.msra.mxu0 0.0
  %89 = vmatprep.subr.mxu0 0.0
  %90 = vmatpush1.msra.mxu0 0.0
  %91 = vmatprep.subr.mxu0 0.0
  %92 = vmatpush1.msra.mxu0 0.0
  %93 = vmatprep.subr.mxu0 0.0
  %94 = vmatpush1.msra.mxu0 0.0
  %95 = vmatprep.subr.mxu0 0.0
  %96 = vmatpush1.msra.mxu0 0.0
  %97 = vmatprep.subr.mxu0 0.0
  %98 = vmatpush1.msra.mxu0 0.0
  %99 = vmatprep.subr.mxu0 0.0
  %100 = vmatpush1.msra.mxu0 0.0
  %101 = vmatprep.subr.mxu0 0.0
  %102 = vmatpush1.msra.mxu0 0.0
  %103 = vmatprep.subr.mxu0 0.0
  %104 = vmatpush1.msra.mxu0 0.0
  %105 = vmatprep.subr.mxu0 0.0
  %106 = vmatpush1.msra.mxu0 0.0
  %107 = vmatprep.subr.mxu0 0.0
  %108 = vmatpush1.msra.mxu0 0.0
  %109 = vmatprep.mubr.f32.mxu0 0.0
  %110 = vmatmul.mubr.f32.gmra.mrb[0].mxu0 %v36
  %v111 = vpop.f32.mrb[0].mxu0
  %v112 = vadd.f32 %v32, %v111
  %v113 = vpop.f32.mrb[0].mxu0
  %114 = vmatprep.mubr.f32.mxu0 0.0
  %115 = vmatmul.mubr.f32.gmra.mrb[0].mxu0 %v39
  %v116 = vpop.f32.mrb[0].mxu0
  %v117 = vadd.f32 %v32, %v116
  %v118 = vpop.f32.mrb[0].mxu0
  %119 = vdwg.mxu0
  %120 = vst [vmem:[#allocation2] sm:$0xff] %v112
  %121 = vst [vmem:[#allocation2 + $0x8] sm:$0xff] %v117
  %v122 = vld [vmem:[%s2] sm:$0xff]
  %v123 = vld [vmem:[%s2 + $0x8] sm:$0xff]
  %v124 = vld [vmem:[%s2 + $0x10] sm:$0xff]
  %v125 = vld [vmem:[%s2 + $0x18] sm:$0xff]
  %v126 = vld [vmem:[%s2 + $0x20] sm:$0xff]
  %v127 = vld [vmem:[%s2 + $0x28] sm:$0xff]
  %v128 = vld [vmem:[%s2 + $0x30] sm:$0xff]
  %v129 = vld [vmem:[%s2 + $0x38] sm:$0xff]
  %v130 = vld [vmem:[%s2 + $0x40] sm:$0xff]
  %v131 = vld [vmem:[%s2 + $0x48] sm:$0xff]
  %v132 = vld [vmem:[%s2 + $0x50] sm:$0xff]
  %v133 = vld [vmem:[%s2 + $0x58] sm:$0xff]
  %v134 = vld [vmem:[%s2 + $0x60] sm:$0xff]
  %v135 = vld [vmem:[%s2 + $0x68] sm:$0xff]
  %v136 = vld [vmem:[%s2 + $0x70] sm:$0xff]
  %v137 = vld [vmem:[%s2 + $0x78] sm:$0xff]
  %v138 = vld [vmem:[#allocation2] sm:$0x3]
  %139 = vmatprep.subr.mxu0 0.0
  %140 = vmatpush1.msra.mxu0 %v122
  %141 = vmatprep.subr.mxu0 0.0
  %142 = vmatpush1.msra.mxu0 %v123
  %143 = vmatprep.subr.mxu0 0.0
  %144 = vmatpush1.msra.mxu0 %v124
  %145 = vmatprep.subr.mxu0 0.0
  %146 = vmatpush1.msra.mxu0 %v125
  %147 = vmatprep.subr.mxu0 0.0
  %148 = vmatpush1.msra.mxu0 %v126
  %149 = vmatprep.subr.mxu0 0.0
  %150 = vmatpush1.msra.mxu0 %v127
  %151 = vmatprep.subr.mxu0 0.0
  %152 = vmatpush1.msra.mxu0 %v128
  %153 = vmatprep.subr.mxu0 0.0
  %154 = vmatpush1.msra.mxu0 %v129
  %155 = vmatprep.subr.mxu0 0.0
  %156 = vmatpush1.msra.mxu0 %v130
  %157 = vmatprep.subr.mxu0 0.0
  %158 = vmatpush1.msra.mxu0 %v131
  %159 = vmatprep.subr.mxu0 0.0
  %160 = vmatpush1.msra.mxu0 %v132
  %161 = vmatprep.subr.mxu0 0.0
  %162 = vmatpush1.msra.mxu0 %v133
  %163 = vmatprep.subr.mxu0 0.0
  %164 = vmatpush1.msra.mxu0 %v134
  %165 = vmatprep.subr.mxu0 0.0
  %166 = vmatpush1.msra.mxu0 %v135
  %167 = vmatprep.subr.mxu0 0.0
  %168 = vmatpush1.msra.mxu0 %v136
  %169 = vmatprep.subr.mxu0 0.0
  %170 = vmatpush1.msra.mxu0 %v137
  %171 = vmatprep.subr.mxu0 0.0
  %172 = vmatpush1.msra.mxu0 0.0
  %173 = vmatprep.subr.mxu0 0.0
  %174 = vmatpush1.msra.mxu0 0.0
  %175 = vmatprep.subr.mxu0 0.0
  %176 = vmatpush1.msra.mxu0 0.0
  %177 = vmatprep.subr.mxu0 0.0
  %178 = vmatpush1.msra.mxu0 0.0
  %179 = vmatprep.subr.mxu0 0.0
  %180 = vmatpush1.msra.mxu0 0.0
  %181 = vmatprep.subr.mxu0 0.0
  %182 = vmatpush1.msra.mxu0 0.0
  %183 = vmatprep.subr.mxu0 0.0
  %184 = vmatpush1.msra.mxu0 0.0
  %185 = vmatprep.subr.mxu0 0.0
  %186 = vmatpush1.msra.mxu0 0.0
  %187 = vmatprep.subr.mxu0 0.0
  %188 = vmatpush1.msra.mxu0 0.0
  %189 = vmatprep.subr.mxu0 0.0
  %190 = vmatpush1.msra.mxu0 0.0
  %191 = vmatprep.subr.mxu0 0.0
  %192 = vmatpush1.msra.mxu0 0.0
  %193 = vmatprep.subr.mxu0 0.0
  %194 = vmatpush1.msra.mxu0 0.0
  %195 = vmatprep.subr.mxu0 0.0
  %196 = vmatpush1.msra.mxu0 0.0
  %197 = vmatprep.subr.mxu0 0.0
  %198 = vmatpush1.msra.mxu0 0.0
  %199 = vmatprep.subr.mxu0 0.0
  %200 = vmatpush1.msra.mxu0 0.0
  %201 = vmatprep.subr.mxu0 0.0
  %202 = vmatpush1.msra.mxu0 0.0
  %203 = vmatprep.mubr.f32.mxu0 0.0
  %204 = vmatmul.mubr.f32.gmra.mrb[0].mxu0 0.0
  %v205 = vpop.f32.mrb[0].mxu0
  %v206 = vadd.f32 0.0, %v205
  %v207 = vpop.f32.mrb[0].mxu0
  %208 = vdwg.mxu0
  %v209 = vadd.f32 %v138, %v206
  %v210 = vxor.u32 %v209, 2147483648
  %v211 = vmul.f32 %v210, 1.442695
  %v212 = vpow.pop %v211
  %v213 = vadd.f32 %v212, 1.0
  %v214 = vrcp.pop %v213
  %v215 = vmul.f32 1.0, %v214
  %v216 = vtanh.pop %v209
  %217 = vrot.lane.b32.xlu0 %v215, 96
  %v218 = vpop.permute.xlu0 %217
  %219 = vrot.lane.b32.xlu0 %v216, 64
  %v220 = vpop.permute.xlu0 %219
  %221 = vrot.lane.b32.xlu0 %v215, 32
  %v222 = vpop.permute.xlu0 %221
  %v223 = vmul.f32 %v218, 0.0
  %v224 = vmul.f32 %v215, %v220
  %v225 = vadd.f32 %v223, %v224
  %v226 = vtanh.pop %v225
  %v227 = vmul.f32 %v222, %v226
  %s228 = scalar_lea.vmem [#allocation2], 2
  %v229 = vld [vmem:[%s228] sm:$0x3]
  %230 = vmatprep.subr.mxu0 0.0
  %231 = vmatpush1.msra.mxu0 %v122
  %232 = vmatprep.subr.mxu0 0.0
  %233 = vmatpush1.msra.mxu0 %v123
  %234 = vmatprep.subr.mxu0 0.0
  %235 = vmatpush1.msra.mxu0 %v124
  %236 = vmatprep.subr.mxu0 0.0
  %237 = vmatpush1.msra.mxu0 %v125
  %238 = vmatprep.subr.mxu0 0.0
  %239 = vmatpush1.msra.mxu0 %v126
  %240 = vmatprep.subr.mxu0 0.0
  %241 = vmatpush1.msra.mxu0 %v127
  %242 = vmatprep.subr.mxu0 0.0
  %243 = vmatpush1.msra.mxu0 %v128
  %244 = vmatprep.subr.mxu0 0.0
  %245 = vmatpush1.msra.mxu0 %v129
  %246 = vmatprep.subr.mxu0 0.0
  %247 = vmatpush1.msra.mxu0 %v130
  %248 = vmatprep.subr.mxu0 0.0
  %249 = vmatpush1.msra.mxu0 %v131
  %250 = vmatprep.subr.mxu0 0.0
  %251 = vmatpush1.msra.mxu0 %v132
  %252 = vmatprep.subr.mxu0 0.0
  %253 = vmatpush1.msra.mxu0 %v133
  %254 = vmatprep.subr.mxu0 0.0
  %255 = vmatpush1.msra.mxu0 %v134
  %256 = vmatprep.subr.mxu0 0.0
  %257 = vmatpush1.msra.mxu0 %v135
  %258 = vmatprep.subr.mxu0 0.0
  %259 = vmatpush1.msra.mxu0 %v136
  %260 = vmatprep.subr.mxu0 0.0
  %261 = vmatpush1.msra.mxu0 %v137
  %262 = vmatprep.subr.mxu0 0.0
  %263 = vmatpush1.msra.mxu0 0.0
  %264 = vmatprep.subr.mxu0 0.0
  %265 = vmatpush1.msra.mxu0 0.0
  %266 = vmatprep.subr.mxu0 0.0
  %267 = vmatpush1.msra.mxu0 0.0
  %268 = vmatprep.subr.mxu0 0.0
  %269 = vmatpush1.msra.mxu0 0.0
  %270 = vmatprep.subr.mxu0 0.0
  %271 = vmatpush1.msra.mxu0 0.0
  %272 = vmatprep.subr.mxu0 0.0
  %273 = vmatpush1.msra.mxu0 0.0
  %274 = vmatprep.subr.mxu0 0.0
  %275 = vmatpush1.msra.mxu0 0.0
  %276 = vmatprep.subr.mxu0 0.0
  %277 = vmatpush1.msra.mxu0 0.0
  %278 = vmatprep.subr.mxu0 0.0
  %279 = vmatpush1.msra.mxu0 0.0
  %280 = vmatprep.subr.mxu0 0.0
  %281 = vmatpush1.msra.mxu0 0.0
  %282 = vmatprep.subr.mxu0 0.0
  %283 = vmatpush1.msra.mxu0 0.0
  %284 = vmatprep.subr.mxu0 0.0
  %285 = vmatpush1.msra.mxu0 0.0
  %286 = vmatprep.subr.mxu0 0.0
  %287 = vmatpush1.msra.mxu0 0.0
  %288 = vmatprep.subr.mxu0 0.0
  %289 = vmatpush1.msra.mxu0 0.0
  %290 = vmatprep.subr.mxu0 0.0
  %291 = vmatpush1.msra.mxu0 0.0
  %292 = vmatprep.subr.mxu0 0.0
  %293 = vmatpush1.msra.mxu0 0.0
  %294 = vmatprep.mubr.f32.mxu0 0.0
  %295 = vmatmul.mubr.f32.gmra.mrb[0].mxu0 %v227
  %v296 = vpop.f32.mrb[0].mxu0
  %v297 = vadd.f32 0.0, %v296
  %v298 = vpop.f32.mrb[0].mxu0
  %299 = vdwg.mxu0
  %v300 = vadd.f32 %v229, %v297
  %v301 = vxor.u32 %v300, 2147483648
  %v302 = vmul.f32 %v301, 1.442695
  %v303 = vpow.pop %v302
  %v304 = vadd.f32 %v303, 1.0
  %v305 = vrcp.pop %v304
  %v306 = vmul.f32 1.0, %v305
  %v307 = vtanh.pop %v300
  %308 = vrot.lane.b32.xlu0 %v306, 96
  %v309 = vpop.permute.xlu0 %308
  %310 = vrot.lane.b32.xlu0 %v307, 64
  %v311 = vpop.permute.xlu0 %310
  %312 = vrot.lane.b32.xlu0 %v306, 32
  %v313 = vpop.permute.xlu0 %312
  %v314 = vmul.f32 %v309, %v225
  %v315 = vmul.f32 %v306, %v311
  %v316 = vadd.f32 %v314, %v315
  %v317 = vtanh.pop %v316
  %v318 = vmul.f32 %v313, %v317
  %s319 = scalar_lea.vmem [#allocation2], 4
  %v320 = vld [vmem:[%s319] sm:$0x3]
  %321 = vmatprep.subr.mxu0 0.0
  %322 = vmatpush1.msra.mxu0 %v122
  %323 = vmatprep.subr.mxu0 0.0
  %324 = vmatpush1.msra.mxu0 %v123
  %325 = vmatprep.subr.mxu0 0.0
  %326 = vmatpush1.msra.mxu0 %v124
  %327 = vmatprep.subr.mxu0 0.0
  %328 = vmatpush1.msra.mxu0 %v125
  %329 = vmatprep.subr.mxu0 0.0
  %330 = vmatpush1.msra.mxu0 %v126
  %331 = vmatprep.subr.mxu0 0.0
  %332 = vmatpush1.msra.mxu0 %v127
  %333 = vmatprep.subr.mxu0 0.0
  %334 = vmatpush1.msra.mxu0 %v128
  %335 = vmatprep.subr.mxu0 0.0
  %336 = vmatpush1.msra.mxu0 %v129
  %337 = vmatprep.subr.mxu0 0.0
  %338 = vmatpush1.msra.mxu0 %v130
  %339 = vmatprep.subr.mxu0 0.0
  %340 = vmatpush1.msra.mxu0 %v131
  %341 = vmatprep.subr.mxu0 0.0
  %342 = vmatpush1.msra.mxu0 %v132
  %343 = vmatprep.subr.mxu0 0.0
  %344 = vmatpush1.msra.mxu0 %v133
  %345 = vmatprep.subr.mxu0 0.0
  %346 = vmatpush1.msra.mxu0 %v134
  %347 = vmatprep.subr.mxu0 0.0
  %348 = vmatpush1.msra.mxu0 %v135
  %349 = vmatprep.subr.mxu0 0.0
  %350 = vmatpush1.msra.mxu0 %v136
  %351 = vmatprep.subr.mxu0 0.0
  %352 = vmatpush1.msra.mxu0 %v137
  %353 = vmatprep.subr.mxu0 0.0
  %354 = vmatpush1.msra.mxu0 0.0
  %355 = vmatprep.subr.mxu0 0.0
  %356 = vmatpush1.msra.mxu0 0.0
  %357 = vmatprep.subr.mxu0 0.0
  %358 = vmatpush1.msra.mxu0 0.0
  %359 = vmatprep.subr.mxu0 0.0
  %360 = vmatpush1.msra.mxu0 0.0
  %361 = vmatprep.subr.mxu0 0.0
  %362 = vmatpush1.msra.mxu0 0.0
  %363 = vmatprep.subr.mxu0 0.0
  %364 = vmatpush1.msra.mxu0 0.0
  %365 = vmatprep.subr.mxu0 0.0
  %366 = vmatpush1.msra.mxu0 0.0
  %367 = vmatprep.subr.mxu0 0.0
  %368 = vmatpush1.msra.mxu0 0.0
  %369 = vmatprep.subr.mxu0 0.0
  %370 = vmatpush1.msra.mxu0 0.0
  %371 = vmatprep.subr.mxu0 0.0
  %372 = vmatpush1.msra.mxu0 0.0
  %373 = vmatprep.subr.mxu0 0.0
  %374 = vmatpush1.msra.mxu0 0.0
  %375 = vmatprep.subr.mxu0 0.0
  %376 = vmatpush1.msra.mxu0 0.0
  %377 = vmatprep.subr.mxu0 0.0
  %378 = vmatpush1.msra.mxu0 0.0
  %379 = vmatprep.subr.mxu0 0.0
  %380 = vmatpush1.msra.mxu0 0.0
  %381 = vmatprep.subr.mxu0 0.0
  %382 = vmatpush1.msra.mxu0 0.0
  %383 = vmatprep.subr.mxu0 0.0
  %384 = vmatpush1.msra.mxu0 0.0
  %385 = vmatprep.mubr.f32.mxu0 0.0
  %386 = vmatmul.mubr.f32.gmra.mrb[0].mxu0 %v318
  %v387 = vpop.f32.mrb[0].mxu0
  %v388 = vadd.f32 0.0, %v387
  %v389 = vpop.f32.mrb[0].mxu0
  %390 = vdwg.mxu0
  %v391 = vadd.f32 %v320, %v388
  %v392 = vxor.u32 %v391, 2147483648
  %v393 = vmul.f32 %v392, 1.442695
  %v394 = vpow.pop %v393
  %v395 = vadd.f32 %v394, 1.0
  %v396 = vrcp.pop %v395
  %v397 = vmul.f32 1.0, %v396
  %v398 = vtanh.pop %v391
  %399 = vrot.lane.b32.xlu0 %v397, 96
  %v400 = vpop.permute.xlu0 %399
  %401 = vrot.lane.b32.xlu0 %v398, 64
  %v402 = vpop.permute.xlu0 %401
  %403 = vrot.lane.b32.xlu0 %v397, 32
  %v404 = vpop.permute.xlu0 %403
  %v405 = vmul.f32 %v400, %v316
  %v406 = vmul.f32 %v397, %v402
  %v407 = vadd.f32 %v405, %v406
  %v408 = vtanh.pop %v407
  %v409 = vmul.f32 %v404, %v408
  %s410 = scalar_lea.vmem [#allocation2], 6
  %v411 = vld [vmem:[%s410] sm:$0x3]
  %412 = vmatprep.subr.mxu0 0.0
  %413 = vmatpush1.msra.mxu0 %v122
  %414 = vmatprep.subr.mxu0 0.0
  %415 = vmatpush1.msra.mxu0 %v123
  %416 = vmatprep.subr.mxu0 0.0
  %417 = vmatpush1.msra.mxu0 %v124
  %418 = vmatprep.subr.mxu0 0.0
  %419 = vmatpush1.msra.mxu0 %v125
  %420 = vmatprep.subr.mxu0 0.0
  %421 = vmatpush1.msra.mxu0 %v126
  %422 = vmatprep.subr.mxu0 0.0
  %423 = vmatpush1.msra.mxu0 %v127
  %424 = vmatprep.subr.mxu0 0.0
  %425 = vmatpush1.msra.mxu0 %v128
  %426 = vmatprep.subr.mxu0 0.0
  %427 = vmatpush1.msra.mxu0 %v129
  %428 = vmatprep.subr.mxu0 0.0
  %429 = vmatpush1.msra.mxu0 %v130
  %430 = vmatprep.subr.mxu0 0.0
  %431 = vmatpush1.msra.mxu0 %v131
  %432 = vmatprep.subr.mxu0 0.0
  %433 = vmatpush1.msra.mxu0 %v132
  %434 = vmatprep.subr.mxu0 0.0
  %435 = vmatpush1.msra.mxu0 %v133
  %436 = vmatprep.subr.mxu0 0.0
  %437 = vmatpush1.msra.mxu0 %v134
  %438 = vmatprep.subr.mxu0 0.0
  %439 = vmatpush1.msra.mxu0 %v135
  %440 = vmatprep.subr.mxu0 0.0
  %441 = vmatpush1.msra.mxu0 %v136
  %442 = vmatprep.subr.mxu0 0.0
  %443 = vmatpush1.msra.mxu0 %v137
  %444 = vmatprep.subr.mxu0 0.0
  %445 = vmatpush1.msra.mxu0 0.0
  %446 = vmatprep.subr.mxu0 0.0
  %447 = vmatpush1.msra.mxu0 0.0
  %448 = vmatprep.subr.mxu0 0.0
  %449 = vmatpush1.msra.mxu0 0.0
  %450 = vmatprep.subr.mxu0 0.0
  %451 = vmatpush1.msra.mxu0 0.0
  %452 = vmatprep.subr.mxu0 0.0
  %453 = vmatpush1.msra.mxu0 0.0
  %454 = vmatprep.subr.mxu0 0.0
  %455 = vmatpush1.msra.mxu0 0.0
  %456 = vmatprep.subr.mxu0 0.0
  %457 = vmatpush1.msra.mxu0 0.0
  %458 = vmatprep.subr.mxu0 0.0
  %459 = vmatpush1.msra.mxu0 0.0
  %460 = vmatprep.subr.mxu0 0.0
  %461 = vmatpush1.msra.mxu0 0.0
  %462 = vmatprep.subr.mxu0 0.0
  %463 = vmatpush1.msra.mxu0 0.0
  %464 = vmatprep.subr.mxu0 0.0
  %465 = vmatpush1.msra.mxu0 0.0
  %466 = vmatprep.subr.mxu0 0.0
  %467 = vmatpush1.msra.mxu0 0.0
  %468 = vmatprep.subr.mxu0 0.0
  %469 = vmatpush1.msra.mxu0 0.0
  %470 = vmatprep.subr.mxu0 0.0
  %471 = vmatpush1.msra.mxu0 0.0
  %472 = vmatprep.subr.mxu0 0.0
  %473 = vmatpush1.msra.mxu0 0.0
  %474 = vmatprep.subr.mxu0 0.0
  %475 = vmatpush1.msra.mxu0 0.0
  %476 = vmatprep.mubr.f32.mxu0 0.0
  %477 = vmatmul.mubr.f32.gmra.mrb[0].mxu0 %v409
  %v478 = vpop.f32.mrb[0].mxu0
  %v479 = vadd.f32 0.0, %v478
  %v480 = vpop.f32.mrb[0].mxu0
  %481 = vdwg.mxu0
  %v482 = vadd.f32 %v411, %v479
  %v483 = vxor.u32 %v482, 2147483648
  %v484 = vmul.f32 %v483, 1.442695
  %v485 = vpow.pop %v484
  %v486 = vadd.f32 %v485, 1.0
  %v487 = vrcp.pop %v486
  %v488 = vmul.f32 1.0, %v487
  %v489 = vtanh.pop %v482
  %490 = vrot.lane.b32.xlu0 %v488, 96
  %v491 = vpop.permute.xlu0 %490
  %492 = vrot.lane.b32.xlu0 %v489, 64
  %v493 = vpop.permute.xlu0 %492
  %494 = vrot.lane.b32.xlu0 %v488, 32
  %v495 = vpop.permute.xlu0 %494
  %v496 = vmul.f32 %v491, %v407
  %v497 = vmul.f32 %v488, %v493
  %v498 = vadd.f32 %v496, %v497
  %v499 = vtanh.pop %v498
  %v500 = vmul.f32 %v495, %v499
  %s501 = scalar_lea.vmem [#allocation2], 8
  %v502 = vld [vmem:[%s501] sm:$0x3]
  %503 = vmatprep.subr.mxu0 0.0
  %504 = vmatpush1.msra.mxu0 %v122
  %505 = vmatprep.subr.mxu0 0.0
  %506 = vmatpush1.msra.mxu0 %v123
  %507 = vmatprep.subr.mxu0 0.0
  %508 = vmatpush1.msra.mxu0 %v124
  %509 = vmatprep.subr.mxu0 0.0
  %510 = vmatpush1.msra.mxu0 %v125
  %511 = vmatprep.subr.mxu0 0.0
  %512 = vmatpush1.msra.mxu0 %v126
  %513 = vmatprep.subr.mxu0 0.0
  %514 = vmatpush1.msra.mxu0 %v127
  %515 = vmatprep.subr.mxu0 0.0
  %516 = vmatpush1.msra.mxu0 %v128
  %517 = vmatprep.subr.mxu0 0.0
  %518 = vmatpush1.msra.mxu0 %v129
  %519 = vmatprep.subr.mxu0 0.0
  %520 = vmatpush1.msra.mxu0 %v130
  %521 = vmatprep.subr.mxu0 0.0
  %522 = vmatpush1.msra.mxu0 %v131
  %523 = vmatprep.subr.mxu0 0.0
  %524 = vmatpush1.msra.mxu0 %v132
  %525 = vmatprep.subr.mxu0 0.0
  %526 = vmatpush1.msra.mxu0 %v133
  %527 = vmatprep.subr.mxu0 0.0
  %528 = vmatpush1.msra.mxu0 %v134
  %529 = vmatprep.subr.mxu0 0.0
  %530 = vmatpush1.msra.mxu0 %v135
  %531 = vmatprep.subr.mxu0 0.0
  %532 = vmatpush1.msra.mxu0 %v136
  %533 = vmatprep.subr.mxu0 0.0
  %534 = vmatpush1.msra.mxu0 %v137
  %535 = vmatprep.subr.mxu0 0.0
  %536 = vmatpush1.msra.mxu0 0.0
  %537 = vmatprep.subr.mxu0 0.0
  %538 = vmatpush1.msra.mxu0 0.0
  %539 = vmatprep.subr.mxu0 0.0
  %540 = vmatpush1.msra.mxu0 0.0
  %541 = vmatprep.subr.mxu0 0.0
  %542 = vmatpush1.msra.mxu0 0.0
  %543 = vmatprep.subr.mxu0 0.0
  %544 = vmatpush1.msra.mxu0 0.0
  %545 = vmatprep.subr.mxu0 0.0
  %546 = vmatpush1.msra.mxu0 0.0
  %547 = vmatprep.subr.mxu0 0.0
  %548 = vmatpush1.msra.mxu0 0.0
  %549 = vmatprep.subr.mxu0 0.0
  %550 = vmatpush1.msra.mxu0 0.0
  %551 = vmatprep.subr.mxu0 0.0
  %552 = vmatpush1.msra.mxu0 0.0
  %553 = vmatprep.subr.mxu0 0.0
  %554 = vmatpush1.msra.mxu0 0.0
  %555 = vmatprep.subr.mxu0 0.0
  %556 = vmatpush1.msra.mxu0 0.0
  %557 = vmatprep.subr.mxu0 0.0
  %558 = vmatpush1.msra.mxu0 0.0
  %559 = vmatprep.subr.mxu0 0.0
  %560 = vmatpush1.msra.mxu0 0.0
  %561 = vmatprep.subr.mxu0 0.0
  %562 = vmatpush1.msra.mxu0 0.0
  %563 = vmatprep.subr.mxu0 0.0
  %564 = vmatpush1.msra.mxu0 0.0
  %565 = vmatprep.subr.mxu0 0.0
  %566 = vmatpush1.msra.mxu0 0.0
  %567 = vmatprep.mubr.f32.mxu0 0.0
  %568 = vmatmul.mubr.f32.gmra.mrb[0].mxu0 %v500
  %v569 = vpop.f32.mrb[0].mxu0
  %v570 = vadd.f32 0.0, %v569
  %v571 = vpop.f32.mrb[0].mxu0
  %572 = vdwg.mxu0
  %v573 = vadd.f32 %v502, %v570
  %v574 = vxor.u32 %v573, 2147483648
  %v575 = vmul.f32 %v574, 1.442695
  %v576 = vpow.pop %v575
  %v577 = vadd.f32 %v576, 1.0
  %v578 = vrcp.pop %v577
  %v579 = vmul.f32 1.0, %v578
  %v580 = vtanh.pop %v573
  %581 = vrot.lane.b32.xlu0 %v579, 96
  %v582 = vpop.permute.xlu0 %581
  %583 = vrot.lane.b32.xlu0 %v580, 64
  %v584 = vpop.permute.xlu0 %583
  %585 = vrot.lane.b32.xlu0 %v579, 32
  %v586 = vpop.permute.xlu0 %585
  %v587 = vmul.f32 %v582, %v498
  %v588 = vmul.f32 %v579, %v584
  %v589 = vadd.f32 %v587, %v588
  %v590 = vtanh.pop %v589
  %v591 = vmul.f32 %v586, %v590
  %s592 = scalar_lea.vmem [#allocation2], 10
  %v593 = vld [vmem:[%s592] sm:$0x3]
  %594 = vmatprep.subr.mxu0 0.0
  %595 = vmatpush1.msra.mxu0 %v122
  %596 = vmatprep.subr.mxu0 0.0
  %597 = vmatpush1.msra.mxu0 %v123
  %598 = vmatprep.subr.mxu0 0.0
  %599 = vmatpush1.msra.mxu0 %v124
  %600 = vmatprep.subr.mxu0 0.0
  %601 = vmatpush1.msra.mxu0 %v125
  %602 = vmatprep.subr.mxu0 0.0
  %603 = vmatpush1.msra.mxu0 %v126
  %604 = vmatprep.subr.mxu0 0.0
  %605 = vmatpush1.msra.mxu0 %v127
  %606 = vmatprep.subr.mxu0 0.0
  %607 = vmatpush1.msra.mxu0 %v128
  %608 = vmatprep.subr.mxu0 0.0
  %609 = vmatpush1.msra.mxu0 %v129
  %610 = vmatprep.subr.mxu0 0.0
  %611 = vmatpush1.msra.mxu0 %v130
  %612 = vmatprep.subr.mxu0 0.0
  %613 = vmatpush1.msra.mxu0 %v131
  %614 = vmatprep.subr.mxu0 0.0
  %615 = vmatpush1.msra.mxu0 %v132
  %616 = vmatprep.subr.mxu0 0.0
  %617 = vmatpush1.msra.mxu0 %v133
  %618 = vmatprep.subr.mxu0 0.0
  %619 = vmatpush1.msra.mxu0 %v134
  %620 = vmatprep.subr.mxu0 0.0
  %621 = vmatpush1.msra.mxu0 %v135
  %622 = vmatprep.subr.mxu0 0.0
  %623 = vmatpush1.msra.mxu0 %v136
  %624 = vmatprep.subr.mxu0 0.0
  %625 = vmatpush1.msra.mxu0 %v137
  %626 = vmatprep.subr.mxu0 0.0
  %627 = vmatpush1.msra.mxu0 0.0
  %628 = vmatprep.subr.mxu0 0.0
  %629 = vmatpush1.msra.mxu0 0.0
  %630 = vmatprep.subr.mxu0 0.0
  %631 = vmatpush1.msra.mxu0 0.0
  %632 = vmatprep.subr.mxu0 0.0
  %633 = vmatpush1.msra.mxu0 0.0
  %634 = vmatprep.subr.mxu0 0.0
  %635 = vmatpush1.msra.mxu0 0.0
  %636 = vmatprep.subr.mxu0 0.0
  %637 = vmatpush1.msra.mxu0 0.0
  %638 = vmatprep.subr.mxu0 0.0
  %639 = vmatpush1.msra.mxu0 0.0
  %640 = vmatprep.subr.mxu0 0.0
  %641 = vmatpush1.msra.mxu0 0.0
  %642 = vmatprep.subr.mxu0 0.0
  %643 = vmatpush1.msra.mxu0 0.0
  %644 = vmatprep.subr.mxu0 0.0
  %645 = vmatpush1.msra.mxu0 0.0
  %646 = vmatprep.subr.mxu0 0.0
  %647 = vmatpush1.msra.mxu0 0.0
  %648 = vmatprep.subr.mxu0 0.0
  %649 = vmatpush1.msra.mxu0 0.0
  %650 = vmatprep.subr.mxu0 0.0
  %651 = vmatpush1.msra.mxu0 0.0
  %652 = vmatprep.subr.mxu0 0.0
  %653 = vmatpush1.msra.mxu0 0.0
  %654 = vmatprep.subr.mxu0 0.0
  %655 = vmatpush1.msra.mxu0 0.0
  %656 = vmatprep.subr.mxu0 0.0
  %657 = vmatpush1.msra.mxu0 0.0
  %658 = vmatprep.mubr.f32.mxu0 0.0
  %659 = vmatmul.mubr.f32.gmra.mrb[0].mxu0 %v591
  %v660 = vpop.f32.mrb[0].mxu0
  %v661 = vadd.f32 0.0, %v660
  %v662 = vpop.f32.mrb[0].mxu0
  %663 = vdwg.mxu0
  %v664 = vadd.f32 %v593, %v661
  %v665 = vxor.u32 %v664, 2147483648
  %v666 = vmul.f32 %v665, 1.442695
  %v667 = vpow.pop %v666
  %v668 = vadd.f32 %v667, 1.0
  %v669 = vrcp.pop %v668
  %v670 = vmul.f32 1.0, %v669
  %v671 = vtanh.pop %v664
  %672 = vrot.lane.b32.xlu0 %v670, 96
  %v673 = vpop.permute.xlu0 %672
  %674 = vrot.lane.b32.xlu0 %v671, 64
  %v675 = vpop.permute.xlu0 %674
  %676 = vrot.lane.b32.xlu0 %v670, 32
  %v677 = vpop.permute.xlu0 %676
  %v678 = vmul.f32 %v673, %v589
  %v679 = vmul.f32 %v670, %v675
  %v680 = vadd.f32 %v678, %v679
  %v681 = vtanh.pop %v680
  %v682 = vmul.f32 %v677, %v681
  %s683 = scalar_lea.vmem [#allocation2], 12
  %v684 = vld [vmem:[%s683] sm:$0x3]
  %685 = vmatprep.subr.mxu0 0.0
  %686 = vmatpush1.msra.mxu0 %v122
  %687 = vmatprep.subr.mxu0 0.0
  %688 = vmatpush1.msra.mxu0 %v123
  %689 = vmatprep.subr.mxu0 0.0
  %690 = vmatpush1.msra.mxu0 %v124
  %691 = vmatprep.subr.mxu0 0.0
  %692 = vmatpush1.msra.mxu0 %v125
  %693 = vmatprep.subr.mxu0 0.0
  %694 = vmatpush1.msra.mxu0 %v126
  %695 = vmatprep.subr.mxu0 0.0
  %696 = vmatpush1.msra.mxu0 %v127
  %697 = vmatprep.subr.mxu0 0.0
  %698 = vmatpush1.msra.mxu0 %v128
  %699 = vmatprep.subr.mxu0 0.0
  %700 = vmatpush1.msra.mxu0 %v129
  %701 = vmatprep.subr.mxu0 0.0
  %702 = vmatpush1.msra.mxu0 %v130
  %703 = vmatprep.subr.mxu0 0.0
  %704 = vmatpush1.msra.mxu0 %v131
  %705 = vmatprep.subr.mxu0 0.0
  %706 = vmatpush1.msra.mxu0 %v132
  %707 = vmatprep.subr.mxu0 0.0
  %708 = vmatpush1.msra.mxu0 %v133
  %709 = vmatprep.subr.mxu0 0.0
  %710 = vmatpush1.msra.mxu0 %v134
  %711 = vmatprep.subr.mxu0 0.0
  %712 = vmatpush1.msra.mxu0 %v135
  %713 = vmatprep.subr.mxu0 0.0
  %714 = vmatpush1.msra.mxu0 %v136
  %715 = vmatprep.subr.mxu0 0.0
  %716 = vmatpush1.msra.mxu0 %v137
  %717 = vmatprep.subr.mxu0 0.0
  %718 = vmatpush1.msra.mxu0 0.0
  %719 = vmatprep.subr.mxu0 0.0
  %720 = vmatpush1.msra.mxu0 0.0
  %721 = vmatprep.subr.mxu0 0.0
  %722 = vmatpush1.msra.mxu0 0.0
  %723 = vmatprep.subr.mxu0 0.0
  %724 = vmatpush1.msra.mxu0 0.0
  %725 = vmatprep.subr.mxu0 0.0
  %726 = vmatpush1.msra.mxu0 0.0
  %727 = vmatprep.subr.mxu0 0.0
  %728 = vmatpush1.msra.mxu0 0.0
  %729 = vmatprep.subr.mxu0 0.0
  %730 = vmatpush1.msra.mxu0 0.0
  %731 = vmatprep.subr.mxu0 0.0
  %732 = vmatpush1.msra.mxu0 0.0
  %733 = vmatprep.subr.mxu0 0.0
  %734 = vmatpush1.msra.mxu0 0.0
  %735 = vmatprep.subr.mxu0 0.0
  %736 = vmatpush1.msra.mxu0 0.0
  %737 = vmatprep.subr.mxu0 0.0
  %738 = vmatpush1.msra.mxu0 0.0
  %739 = vmatprep.subr.mxu0 0.0
  %740 = vmatpush1.msra.mxu0 0.0
  %741 = vmatprep.subr.mxu0 0.0
  %742 = vmatpush1.msra.mxu0 0.0
  %743 = vmatprep.subr.mxu0 0.0
  %744 = vmatpush1.msra.mxu0 0.0
  %745 = vmatprep.subr.mxu0 0.0
  %746 = vmatpush1.msra.mxu0 0.0
  %747 = vmatprep.subr.mxu0 0.0
  %748 = vmatpush1.msra.mxu0 0.0
  %749 = vmatprep.mubr.f32.mxu0 0.0
  %750 = vmatmul.mubr.f32.gmra.mrb[0].mxu0 %v682
  %v751 = vpop.f32.mrb[0].mxu0
  %v752 = vadd.f32 0.0, %v751
  %v753 = vpop.f32.mrb[0].mxu0
  %754 = vdwg.mxu0
  %v755 = vadd.f32 %v684, %v752
  %v756 = vxor.u32 %v755, 2147483648
  %v757 = vmul.f32 %v756, 1.442695
  %v758 = vpow.pop %v757
  %v759 = vadd.f32 %v758, 1.0
  %v760 = vrcp.pop %v759
  %v761 = vmul.f32 1.0, %v760
  %v762 = vtanh.pop %v755
  %763 = vrot.lane.b32.xlu0 %v761, 96
  %v764 = vpop.permute.xlu0 %763
  %765 = vrot.lane.b32.xlu0 %v762, 64
  %v766 = vpop.permute.xlu0 %765
  %767 = vrot.lane.b32.xlu0 %v761, 32
  %v768 = vpop.permute.xlu0 %767
  %v769 = vmul.f32 %v764, %v680
  %v770 = vmul.f32 %v761, %v766
  %v771 = vadd.f32 %v769, %v770
  %v772 = vtanh.pop %v771
  %v773 = vmul.f32 %v768, %v772
  %s774 = scalar_lea.vmem [#allocation2], 14
  %v775 = vld [vmem:[%s774] sm:$0x3]
  %776 = vmatprep.subr.mxu0 0.0
  %777 = vmatpush1.msra.mxu0 %v122
  %778 = vmatprep.subr.mxu0 0.0
  %779 = vmatpush1.msra.mxu0 %v123
  %780 = vmatprep.subr.mxu0 0.0
  %781 = vmatpush1.msra.mxu0 %v124
  %782 = vmatprep.subr.mxu0 0.0
  %783 = vmatpush1.msra.mxu0 %v125
  %784 = vmatprep.subr.mxu0 0.0
  %785 = vmatpush1.msra.mxu0 %v126
  %786 = vmatprep.subr.mxu0 0.0
  %787 = vmatpush1.msra.mxu0 %v127
  %788 = vmatprep.subr.mxu0 0.0
  %789 = vmatpush1.msra.mxu0 %v128
  %790 = vmatprep.subr.mxu0 0.0
  %791 = vmatpush1.msra.mxu0 %v129
  %792 = vmatprep.subr.mxu0 0.0
  %793 = vmatpush1.msra.mxu0 %v130
  %794 = vmatprep.subr.mxu0 0.0
  %795 = vmatpush1.msra.mxu0 %v131
  %796 = vmatprep.subr.mxu0 0.0
  %797 = vmatpush1.msra.mxu0 %v132
  %798 = vmatprep.subr.mxu0 0.0
  %799 = vmatpush1.msra.mxu0 %v133
  %800 = vmatprep.subr.mxu0 0.0
  %801 = vmatpush1.msra.mxu0 %v134
  %802 = vmatprep.subr.mxu0 0.0
  %803 = vmatpush1.msra.mxu0 %v135
  %804 = vmatprep.subr.mxu0 0.0
  %805 = vmatpush1.msra.mxu0 %v136
  %806 = vmatprep.subr.mxu0 0.0
  %807 = vmatpush1.msra.mxu0 %v137
  %808 = vmatprep.subr.mxu0 0.0
  %809 = vmatpush1.msra.mxu0 0.0
  %810 = vmatprep.subr.mxu0 0.0
  %811 = vmatpush1.msra.mxu0 0.0
  %812 = vmatprep.subr.mxu0 0.0
  %813 = vmatpush1.msra.mxu0 0.0
  %814 = vmatprep.subr.mxu0 0.0
  %815 = vmatpush1.msra.mxu0 0.0
  %816 = vmatprep.subr.mxu0 0.0
  %817 = vmatpush1.msra.mxu0 0.0
  %818 = vmatprep.subr.mxu0 0.0
  %819 = vmatpush1.msra.mxu0 0.0
  %820 = vmatprep.subr.mxu0 0.0
  %821 = vmatpush1.msra.mxu0 0.0
  %822 = vmatprep.subr.mxu0 0.0
  %823 = vmatpush1.msra.mxu0 0.0
  %824 = vmatprep.subr.mxu0 0.0
  %825 = vmatpush1.msra.mxu0 0.0
  %826 = vmatprep.subr.mxu0 0.0
  %827 = vmatpush1.msra.mxu0 0.0
  %828 = vmatprep.subr.mxu0 0.0
  %829 = vmatpush1.msra.mxu0 0.0
  %830 = vmatprep.subr.mxu0 0.0
  %831 = vmatpush1.msra.mxu0 0.0
  %832 = vmatprep.subr.mxu0 0.0
  %833 = vmatpush1.msra.mxu0 0.0
  %834 = vmatprep.subr.mxu0 0.0
  %835 = vmatpush1.msra.mxu0 0.0
  %836 = vmatprep.subr.mxu0 0.0
  %837 = vmatpush1.msra.mxu0 0.0
  %838 = vmatprep.subr.mxu0 0.0
  %839 = vmatpush1.msra.mxu0 0.0
  %840 = vmatprep.mubr.f32.mxu0 0.0
  %841 = vmatmul.mubr.f32.gmra.mrb[0].mxu0 %v773
  %v842 = vpop.f32.mrb[0].mxu0
  %v843 = vadd.f32 0.0, %v842
  %v844 = vpop.f32.mrb[0].mxu0
  %845 = vdwg.mxu0
  %v846 = vadd.f32 %v775, %v843
  %v847 = vxor.u32 %v846, 2147483648
  %v848 = vmul.f32 %v847, 1.442695
  %v849 = vpow.pop %v848
  %v850 = vadd.f32 %v849, 1.0
  %v851 = vrcp.pop %v850
  %v852 = vmul.f32 1.0, %v851
  %v853 = vtanh.pop %v846
  %854 = vrot.lane.b32.xlu0 %v852, 96
  %v855 = vpop.permute.xlu0 %854
  %856 = vrot.lane.b32.xlu0 %v853, 64
  %v857 = vpop.permute.xlu0 %856
  %858 = vrot.lane.b32.xlu0 %v852, 32
  %v859 = vpop.permute.xlu0 %858
  %v860 = vmul.f32 %v855, %v771
  %v861 = vmul.f32 %v852, %v857
  %v862 = vadd.f32 %v860, %v861
  %v863 = vtanh.pop %v862
  %v864 = vmul.f32 %v859, %v863
  %v865 = vld [vmem:[%s4] sm:$0xff]
  %v866 = vld [vmem:[%s4 + $0x8] sm:$0xff]
  %v867 = vld [vmem:[%s4 + $0x10] sm:$0xff]
  %v868 = vld [vmem:[%s4 + $0x18] sm:$0xff]
  %v869 = vld [vmem:[%s4 + $0x20] sm:$0xff]
  %v870 = vld [vmem:[%s4 + $0x28] sm:$0xff]
  %v871 = vld [vmem:[%s4 + $0x30] sm:$0xff]
  %v872 = vld [vmem:[%s4 + $0x38] sm:$0xff]
  %v873 = vld [vmem:[%s4 + $0x40] sm:$0xff]
  %v874 = vld [vmem:[%s4 + $0x48] sm:$0xff]
  %v875 = vld [vmem:[%s4 + $0x50] sm:$0xff]
  %v876 = vld [vmem:[%s4 + $0x58] sm:$0xff]
  %v877 = vld [vmem:[%s4 + $0x60] sm:$0xff]
  %v878 = vld [vmem:[%s4 + $0x68] sm:$0xff]
  %v879 = vld [vmem:[%s4 + $0x70] sm:$0xff]
  %v880 = vld [vmem:[%s4 + $0x78] sm:$0xff]
  %s881 = sld [smem:[#allocation3]]
  %v882 = vstv %s881
  %883 = vmatprep.subr.mxu0 0.0
  %884 = vmatpush1.msra.mxu0 %v865
  %885 = vmatprep.subr.mxu0 0.0
  %886 = vmatpush1.msra.mxu0 %v866
  %887 = vmatprep.subr.mxu0 0.0
  %888 = vmatpush1.msra.mxu0 %v867
  %889 = vmatprep.subr.mxu0 0.0
  %890 = vmatpush1.msra.mxu0 %v868
  %891 = vmatprep.subr.mxu0 0.0
  %892 = vmatpush1.msra.mxu0 %v869
  %893 = vmatprep.subr.mxu0 0.0
  %894 = vmatpush1.msra.mxu0 %v870
  %895 = vmatprep.subr.mxu0 0.0
  %896 = vmatpush1.msra.mxu0 %v871
  %897 = vmatprep.subr.mxu0 0.0
  %898 = vmatpush1.msra.mxu0 %v872
  %899 = vmatprep.subr.mxu0 0.0
  %900 = vmatpush1.msra.mxu0 %v873
  %901 = vmatprep.subr.mxu0 0.0
  %902 = vmatpush1.msra.mxu0 %v874
  %903 = vmatprep.subr.mxu0 0.0
  %904 = vmatpush1.msra.mxu0 %v875
  %905 = vmatprep.subr.mxu0 0.0
  %906 = vmatpush1.msra.mxu0 %v876
  %907 = vmatprep.subr.mxu0 0.0
  %908 = vmatpush1.msra.mxu0 %v877
  %909 = vmatprep.subr.mxu0 0.0
  %910 = vmatpush1.msra.mxu0 %v878
  %911 = vmatprep.subr.mxu0 0.0
  %912 = vmatpush1.msra.mxu0 %v879
  %913 = vmatprep.subr.mxu0 0.0
  %914 = vmatpush1.msra.mxu0 %v880
  %915 = vmatprep.subr.mxu0 0.0
  %916 = vmatpush1.msra.mxu0 0.0
  %917 = vmatprep.subr.mxu0 0.0
  %918 = vmatpush1.msra.mxu0 0.0
  %919 = vmatprep.subr.mxu0 0.0
  %920 = vmatpush1.msra.mxu0 0.0
  %921 = vmatprep.subr.mxu0 0.0
  %922 = vmatpush1.msra.mxu0 0.0
  %923 = vmatprep.subr.mxu0 0.0
  %924 = vmatpush1.msra.mxu0 0.0
  %925 = vmatprep.subr.mxu0 0.0
  %926 = vmatpush1.msra.mxu0 0.0
  %927 = vmatprep.subr.mxu0 0.0
  %928 = vmatpush1.msra.mxu0 0.0
  %929 = vmatprep.subr.mxu0 0.0
  %930 = vmatpush1.msra.mxu0 0.0
  %931 = vmatprep.subr.mxu0 0.0
  %932 = vmatpush1.msra.mxu0 0.0
  %933 = vmatprep.subr.mxu0 0.0
  %934 = vmatpush1.msra.mxu0 0.0
  %935 = vmatprep.subr.mxu0 0.0
  %936 = vmatpush1.msra.mxu0 0.0
  %937 = vmatprep.subr.mxu0 0.0
  %938 = vmatpush1.msra.mxu0 0.0
  %939 = vmatprep.subr.mxu0 0.0
  %940 = vmatpush1.msra.mxu0 0.0
  %941 = vmatprep.subr.mxu0 0.0
  %942 = vmatpush1.msra.mxu0 0.0
  %943 = vmatprep.subr.mxu0 0.0
  %944 = vmatpush1.msra.mxu0 0.0
  %945 = vmatprep.subr.mxu0 0.0
  %946 = vmatpush1.msra.mxu0 0.0
  %947 = vmatprep.mubr.f32.mxu0 0.0
  %948 = vmatmul.mubr.f32.gmra.mrb[0].mxu0 %v864
  %v949 = vpop.f32.mrb[0].mxu0
  %v950 = vadd.f32 %v882, %v949
  %v951 = vpop.f32.mrb[0].mxu0
  %952 = vdwg.mxu0
  %vm953 = vcmask 1024
  %954 = vst.msk [vmem:[%s6] sm:$0x3] %vm953, %v950
  // Predicated region
  $region26: #{lstm_forward.1} parent=0 // pred_check
    _
  $region27: #{lstm_forward.1} parent=0 // pred_check_branch
    %956 = sbr.rel (0) target = $region29
  $region28: #{lstm_forward.1} parent=0 // pred_region
    _
  $region29: #{lstm_forward.1} parent=0 // pred_fallthru
    _
  // Predicated region
  $region30: #{lstm_forward.1} parent=0 // pred_check
    _
  $region31: #{lstm_forward.1} parent=0 // pred_check_branch
    %958 = sbr.rel (0) target = $region33
  $region32: #{lstm_forward.1} parent=0 // pred_region
    _
  $region33: #{lstm_forward.1} parent=0 // pred_fallthru
    _

</llo_original>
